<compile_context>
chip_gen: v7x
topology: tpu7x:2x2x1
jax: 0.10.0
libtpu: 0.0.40
codegen_flags: <defaults>
</compile_context>

<pallas_src>
import jax
import jax.numpy as jnp
from jax.experimental import pallas as pl
from jax.experimental.pallas import tpu as pltpu


# ----------------------------------------------------------------------------
# Pallas kernel: one grid step computes, for Bt stacked sampled blocks,
#   y = Dt2^-1/2 * A2 @ ((Dt1^-1/2 * A1 @ ((Ds1^-1/2 * X) W1) + b1)_relu
#                        * Ds2^-1/2) W2 + b2
# which equals  A2n @ relu(A1n @ X @ W1 + b1) @ W2 + b2  with the symmetric
# normalization A*n = Dt^-1/2 A Ds^-1/2 (no scaled copy of A is built).
# All tiles are full-array blocks (small shapes) and stay VMEM-resident.
# ----------------------------------------------------------------------------
def _fused_gcn2_kernel(a1_ref, a2_ref, x_ref, w1_ref, b1_ref, w2_ref, b2_ref,
                       o_ref):
    f32 = jnp.float32
    bf16 = jnp.bfloat16

    a1 = a1_ref[...]                      # [Bt, n1, n0] bf16 raw edge counts
    a2 = a2_ref[...]                      # [Bt, n2, n1] bf16
    x = x_ref[...]                        # [Bt, n0, Fin] f32
    bt, n1, n0 = a1.shape
    fin = x.shape[-1]
    hid = w1_ref.shape[-1]
    out = w2_ref.shape[-1]

    def degree_scales(a):
        # Degrees of the sampled block; clamp avoids inf*0 on isolated nodes
        # (their rows/cols of A are all-zero, so the clamp is inert).
        deg_t = jnp.sum(a, axis=2, keepdims=True, dtype=f32)   # [Bt, nt, 1]
        deg_s = jnp.sum(a, axis=1, dtype=f32)[:, :, None]      # [Bt, ns, 1]
        return (jax.lax.rsqrt(jnp.maximum(deg_t, 1.0)),
                jax.lax.rsqrt(jnp.maximum(deg_s, 1.0)))

    # ---- layer 1: GCNConv(Fin -> hidden) + ReLU ----
    rs_t1, rs_s1 = degree_scales(a1)
    xs = (x * rs_s1).astype(bf16)                               # fold Ds^-1/2 into X
    # Batched-across-blocks weight transform: M = Bt*n0 fills the MXU.
    xw = jnp.dot(xs.reshape(bt * n0, fin), w1_ref[...],
                 preferred_element_type=f32)                    # [Bt*n0, H] f32
    xw = xw.reshape(bt, n0, hid).astype(bf16)
    h = jnp.einsum('bts,bsh->bth', a1, xw,
                   preferred_element_type=f32)                  # [Bt, n1, H]
    h = jnp.maximum(h * rs_t1 + b1_ref[...], 0.0)
    # TODO(synk): F.dropout with p=self.dropout=0 is the identity; omitted.

    # ---- layer 2: GCNConv(hidden -> out_layer), no activation ----
    rs_t2, rs_s2 = degree_scales(a2)
    hs = (h * rs_s2).astype(bf16)                               # fold Ds^-1/2 into H
    hw = jnp.dot(hs.reshape(bt * n1, hid), w2_ref[...],
                 preferred_element_type=f32)                    # [Bt*n1, O] f32
    hw = hw.reshape(bt, n1, out).astype(bf16)
    y = jnp.einsum('bts,bso->bto', a2, hw,
                   preferred_element_type=f32)                  # [Bt, n2, O]
    y = y * rs_t2 + b2_ref[...]

    # mode='unsupervised' -> raw embeddings (no log_softmax)
    # TODO(synk): emit bf16 output if downstream tolerates it (halves writeback).
    o_ref[...] = y.astype(o_ref.dtype)


def net_forward(x, a1, a2, params, *, block_batch=None):
    """Fused forward over a batch of B stacked sampled blocks.

    x  : [B, n0, Fin]   source-node features for each sampled block (f32)
    a1 : [B, n1, n0]    raw (0/1 + multiplicities) adjacency, layer-1 block
    a2 : [B, n2, n1]    raw adjacency, layer-2 block
    params: [{"w": [Fin,H], "b": [1,H]}, {"w": [H,O], "b": [1,O]}]
    block_batch: blocks processed per grid step (default: all of them)
    returns [B, n2, O] f32
    """
    B, n0, fin = x.shape
    _, n1, _ = a1.shape
    _, n2, _ = a2.shape
    w1 = params[0]["w"].astype(jnp.bfloat16)
    b1 = params[0]["b"].astype(jnp.float32)
    w2 = params[1]["w"].astype(jnp.bfloat16)
    b2 = params[1]["b"].astype(jnp.float32)
    hid, out = w1.shape[1], w2.shape[1]

    bt = B if block_batch is None else block_batch
    assert B % bt == 0, (B, bt)
    grid = (B // bt,)

    batched = lambda nt, m: pl.BlockSpec((bt, nt, m), lambda g: (g, 0, 0))
    shared = lambda shape: pl.BlockSpec(shape, lambda g: (0, 0))

    return pl.pallas_call(
        _fused_gcn2_kernel,
        out_shape=jax.ShapeDtypeStruct((B, n2, out), jnp.float32),
        grid=grid,
        in_specs=[
            batched(n1, n0),     # a1 (bf16)
            batched(n2, n1),     # a2 (bf16)
            batched(n0, fin),    # x  (f32)
            shared((fin, hid)),  # w1 (bf16)
            shared((1, hid)),    # b1 (f32)
            shared((hid, out)),  # w2 (bf16)
            shared((1, out)),    # b2 (f32)
        ],
        out_specs=batched(n2, out),
        compiler_params=pltpu.CompilerParams(
            dimension_semantics=("parallel",)),
    )(a1.astype(jnp.bfloat16), a2.astype(jnp.bfloat16), x, w1, b1, w2, b2)


# ----------------------------------------------------------------------------
# Host-side glue: dense raw adjacency for a sampled bipartite block, stored in
# bf16 (small integer edge counts are exact in bf16; halves A bytes in HBM).
# Duplicate edges accumulate (scatter-add, like PyG message aggregation);
# self-loops are added only to target nodes that lack one.
# Normalization happens inside the kernel.
# ----------------------------------------------------------------------------
def build_adj(edge_index, num_targets, num_sources):
    src, dst = edge_index  # edge: src (in [0,num_sources)) -> dst (in [0,num_targets))
    adj = jnp.zeros((num_targets, num_sources), dtype=jnp.float32)
    adj = adj.at[dst, src].add(1.0)
    diag = jnp.arange(num_targets)
    missing = (adj[diag, diag] == 0.0).astype(jnp.float32)
    adj = adj.at[diag, diag].add(missing)
    # TODO(synk): PyG's gcn_norm on a sampled bipartite block uses a single
    # target-side degree vector; we use row/col degrees of the sampled block.
    return adj.astype(jnp.bfloat16)


def normalize_ref(adj):
    deg_t = jnp.maximum(adj.sum(axis=1, keepdims=True), 1.0)
    deg_s = jnp.maximum(adj.sum(axis=0, keepdims=True), 1.0)
    return adj * (deg_t ** -0.5) * (deg_s ** -0.5)


def glorot(key, shape):
    fan_in, fan_out = shape
    limit = (6.0 / (fan_in + fan_out)) ** 0.5
    return jax.random.uniform(key, shape, jnp.float32, -limit, limit)


if __name__ == "__main__":
    key = jax.random.PRNGKey(0)
    k_x, k_e, k_w1, k_w2 = jax.random.split(key, 4)

    # Small synthetic sampled-neighborhood setting (defaults of Net).
    num_features = 16
    hidden_layer = 64
    out_layer = 128
    B = 4                    # number of stacked sampled blocks
    block_batch = 2          # blocks per grid step -> grid=(2,), even for v7x megacore
    n0, n1, n2 = 32, 16, 16  # multiples of 16 (bf16 sublane tile), out=128 lane-dense
    e1, e2 = 64, 48          # edges per sampled block

    xs, a1s, a2s = [], [], []
    for b in range(B):
        kb_x = jax.random.fold_in(k_x, b)
        kb_e = jax.random.fold_in(k_e, b)
        xs.append(jax.random.normal(kb_x, (n0, num_features), dtype=jnp.float32))
        src1 = jax.random.randint(jax.random.fold_in(kb_e, 0), (e1,), 0, n0)
        dst1 = jax.random.randint(jax.random.fold_in(kb_e, 1), (e1,), 0, n1)
        src2 = jax.random.randint(jax.random.fold_in(kb_e, 2), (e2,), 0, n1)
        dst2 = jax.random.randint(jax.random.fold_in(kb_e, 3), (e2,), 0, n2)
        a1s.append(build_adj((src1, dst1), n1, n0))
        a2s.append(build_adj((src2, dst2), n2, n1))

    x = jnp.stack(xs)      # [B, n0, F]   f32
    a1 = jnp.stack(a1s)    # [B, n1, n0]  bf16
    a2 = jnp.stack(a2s)    # [B, n2, n1]  bf16

    # deterministic Glorot weights (GCNConv.reset_parameters uses glorot init)
    params = [
        {"w": glorot(k_w1, (num_features, hidden_layer)),
         "b": jnp.zeros((1, hidden_layer), jnp.float32)},
        {"w": glorot(k_w2, (hidden_layer, out_layer)),
         "b": jnp.zeros((1, out_layer), jnp.float32)},
    ]

    out = net_forward(x, a1, a2, params, block_batch=block_batch)
    out = jax.block_until_ready(out)
    assert out.shape == (B, n2, out_layer), out.shape

    # pure-JAX f32 reference (same math, unfused).  The kernel uses bf16 MXU
    # operands with f32 accumulation, so the tolerance reflects that contract.
    refs = []
    for b in range(B):
        r = x[b]
        r = normalize_ref(a1[b].astype(jnp.float32)) @ r @ params[0]["w"] + params[0]["b"]
        r = jnp.maximum(r, 0.0)
        r = normalize_ref(a2[b].astype(jnp.float32)) @ r @ params[1]["w"] + params[1]["b"]
        refs.append(r)
    ref = jnp.stack(refs)
    max_err = float(jnp.max(jnp.abs(out - ref)))
    assert jnp.allclose(out, ref, atol=7.5e-2, rtol=7.5e-2), max_err

    print("KERNEL_OK")
</pallas_src>

<mosaic_0001>
module attributes {stable_mosaic.version = 11 : i64} {
  func.func @_fused_gcn2_kernel(%arg0: i32, %arg1: memref<2x16x32xbf16, #tpu.memory_space<vmem>>, %arg2: memref<2x16x16xbf16, #tpu.memory_space<vmem>>, %arg3: memref<2x32x16xf32, #tpu.memory_space<vmem>>, %arg4: memref<16x64xbf16, #tpu.memory_space<vmem>>, %arg5: memref<1x64xf32, #tpu.memory_space<vmem>>, %arg6: memref<64x128xbf16, #tpu.memory_space<vmem>>, %arg7: memref<1x128xf32, #tpu.memory_space<vmem>>, %arg8: memref<2x16x128xf32, #tpu.memory_space<vmem>>) attributes {dimension_semantics = [#tpu.dimension_semantics<parallel>], iteration_bounds = array<i64: 2>, scalar_prefetch = 0 : i64, scratch_operands = 0 : i64, tpu.core_type = #tpu.core_type<tc>, window_params = [{transform_indices = @transform_0, window_bounds = array<i64: 2, 16, 32>}, {transform_indices = @transform_1, window_bounds = array<i64: 2, 16, 16>}, {transform_indices = @transform_2, window_bounds = array<i64: 2, 32, 16>}, {pipeline_mode = #tpu.pipeline_mode<synchronous>, transform_indices = @transform_3, window_bounds = array<i64: 16, 64>}, {pipeline_mode = #tpu.pipeline_mode<synchronous>, transform_indices = @transform_4, window_bounds = array<i64: 1, 64>}, {pipeline_mode = #tpu.pipeline_mode<synchronous>, transform_indices = @transform_5, window_bounds = array<i64: 64, 128>}, {pipeline_mode = #tpu.pipeline_mode<synchronous>, transform_indices = @transform_6, window_bounds = array<i64: 1, 128>}, {transform_indices = @transform_7, window_bounds = array<i64: 2, 16, 128>}]} {
    %c0 = arith.constant 0 : index
    %c0_0 = arith.constant 0 : index
    %c0_1 = arith.constant 0 : index
    %0 = vector.load %arg1[%c0, %c0_0, %c0_1] : memref<2x16x32xbf16, #tpu.memory_space<vmem>>, vector<2x16x32xbf16>
    %c0_2 = arith.constant 0 : index
    %c0_3 = arith.constant 0 : index
    %c0_4 = arith.constant 0 : index
    %1 = vector.load %arg2[%c0_2, %c0_3, %c0_4] : memref<2x16x16xbf16, #tpu.memory_space<vmem>>, vector<2x16x16xbf16>
    %c0_5 = arith.constant 0 : index
    %c0_6 = arith.constant 0 : index
    %c0_7 = arith.constant 0 : index
    %2 = vector.load %arg3[%c0_5, %c0_6, %c0_7] : memref<2x32x16xf32, #tpu.memory_space<vmem>>, vector<2x32x16xf32>
    %3 = arith.extf %0 : vector<2x16x32xbf16> to vector<2x16x32xf32>
    %cst = arith.constant dense<0.000000e+00> : vector<2x16xf32>
    %4 = vector.multi_reduction <add>, %3, %cst [2] : vector<2x16x32xf32> to vector<2x16xf32>
    %5 = vector.shape_cast %4 : vector<2x16xf32> to vector<2x16x1xf32>
    %6 = arith.extf %0 : vector<2x16x32xbf16> to vector<2x16x32xf32>
    %cst_8 = arith.constant dense<0.000000e+00> : vector<2x32xf32>
    %7 = vector.multi_reduction <add>, %6, %cst_8 [1] : vector<2x16x32xf32> to vector<2x32xf32>
    %8 = vector.shape_cast %7 : vector<2x32xf32> to vector<2x32x1xf32>
    %cst_9 = arith.constant 1.000000e+00 : f32
    %9 = vector.broadcast %cst_9 : f32 to vector<2x16x1xf32>
    %10 = arith.maximumf %5, %9 : vector<2x16x1xf32>
    %11 = math.rsqrt %10 : vector<2x16x1xf32>
    %cst_10 = arith.constant 1.000000e+00 : f32
    %12 = vector.broadcast %cst_10 : f32 to vector<2x32x1xf32>
    %13 = arith.maximumf %8, %12 : vector<2x32x1xf32>
    %14 = math.rsqrt %13 : vector<2x32x1xf32>
    %15 = vector.broadcast %14 : vector<2x32x1xf32> to vector<2x32x16xf32>
    %16 = arith.mulf %2, %15 : vector<2x32x16xf32>
    %17 = arith.truncf %16 : vector<2x32x16xf32> to vector<2x32x16xbf16>
    %18 = vector.shape_cast %17 : vector<2x32x16xbf16> to vector<64x16xbf16>
    %c0_11 = arith.constant 0 : index
    %c0_12 = arith.constant 0 : index
    %19 = vector.load %arg4[%c0_11, %c0_12] : memref<16x64xbf16, #tpu.memory_space<vmem>>, vector<16x64xbf16>
    %cst_13 = arith.constant dense<0.000000e+00> : vector<64x64xf32>
    %20 = tpu.matmul %18, %19, %cst_13 {dimension_numbers = #tpu.dot_dimension_numbers<[1], [0], [0], [1], [0, 0, 1, 1], [], []>} : vector<64x16xbf16>, vector<16x64xbf16>, vector<64x64xf32> -> vector<64x64xf32>
    %21 = vector.shape_cast %20 : vector<64x64xf32> to vector<2x32x64xf32>
    %22 = arith.truncf %21 : vector<2x32x64xf32> to vector<2x32x64xbf16>
    "tpu.trace_start"() <{level = 10 : i32, message = "bts,bsh->bth"}> : () -> ()
    %cst_14 = arith.constant dense<0.000000e+00> : vector<2x16x64xf32>
    %23 = tpu.matmul %0, %22, %cst_14 {dimension_numbers = #tpu.dot_dimension_numbers<[2], [1], [1], [2], [0, 0, 0, 1, 1, 2], [0], [0]>} : vector<2x16x32xbf16>, vector<2x32x64xbf16>, vector<2x16x64xf32> -> vector<2x16x64xf32>
    "tpu.trace_stop"() : () -> ()
    %24 = vector.broadcast %11 : vector<2x16x1xf32> to vector<2x16x64xf32>
    %25 = arith.mulf %23, %24 : vector<2x16x64xf32>
    %c0_15 = arith.constant 0 : index
    %c0_16 = arith.constant 0 : index
    %26 = vector.load %arg5[%c0_15, %c0_16] : memref<1x64xf32, #tpu.memory_space<vmem>>, vector<1x64xf32>
    %27 = vector.shape_cast %26 : vector<1x64xf32> to vector<1x1x64xf32>
    %28 = vector.broadcast %27 : vector<1x1x64xf32> to vector<2x16x64xf32>
    %29 = arith.addf %25, %28 : vector<2x16x64xf32>
    %cst_17 = arith.constant 0.000000e+00 : f32
    %30 = vector.broadcast %cst_17 : f32 to vector<2x16x64xf32>
    %31 = arith.maximumf %29, %30 : vector<2x16x64xf32>
    %32 = arith.extf %1 : vector<2x16x16xbf16> to vector<2x16x16xf32>
    %cst_18 = arith.constant dense<0.000000e+00> : vector<2x16xf32>
    %33 = vector.multi_reduction <add>, %32, %cst_18 [2] : vector<2x16x16xf32> to vector<2x16xf32>
    %34 = vector.shape_cast %33 : vector<2x16xf32> to vector<2x16x1xf32>
    %35 = arith.extf %1 : vector<2x16x16xbf16> to vector<2x16x16xf32>
    %cst_19 = arith.constant dense<0.000000e+00> : vector<2x16xf32>
    %36 = vector.multi_reduction <add>, %35, %cst_19 [1] : vector<2x16x16xf32> to vector<2x16xf32>
    %37 = vector.shape_cast %36 : vector<2x16xf32> to vector<2x16x1xf32>
    %cst_20 = arith.constant 1.000000e+00 : f32
    %38 = vector.broadcast %cst_20 : f32 to vector<2x16x1xf32>
    %39 = arith.maximumf %34, %38 : vector<2x16x1xf32>
    %40 = math.rsqrt %39 : vector<2x16x1xf32>
    %cst_21 = arith.constant 1.000000e+00 : f32
    %41 = vector.broadcast %cst_21 : f32 to vector<2x16x1xf32>
    %42 = arith.maximumf %37, %41 : vector<2x16x1xf32>
    %43 = math.rsqrt %42 : vector<2x16x1xf32>
    %44 = vector.broadcast %43 : vector<2x16x1xf32> to vector<2x16x64xf32>
    %45 = arith.mulf %31, %44 : vector<2x16x64xf32>
    %46 = arith.truncf %45 : vector<2x16x64xf32> to vector<2x16x64xbf16>
    %47 = vector.shape_cast %46 : vector<2x16x64xbf16> to vector<32x64xbf16>
    %c0_22 = arith.constant 0 : index
    %c0_23 = arith.constant 0 : index
    %48 = vector.load %arg6[%c0_22, %c0_23] : memref<64x128xbf16, #tpu.memory_space<vmem>>, vector<64x128xbf16>
    %cst_24 = arith.constant dense<0.000000e+00> : vector<32x128xf32>
    %49 = tpu.matmul %47, %48, %cst_24 {dimension_numbers = #tpu.dot_dimension_numbers<[1], [0], [0], [1], [0, 0, 1, 1], [], []>} : vector<32x64xbf16>, vector<64x128xbf16>, vector<32x128xf32> -> vector<32x128xf32>
    %50 = vector.shape_cast %49 : vector<32x128xf32> to vector<2x16x128xf32>
    %51 = arith.truncf %50 : vector<2x16x128xf32> to vector<2x16x128xbf16>
    "tpu.trace_start"() <{level = 10 : i32, message = "bts,bso->bto"}> : () -> ()
    %cst_25 = arith.constant dense<0.000000e+00> : vector<2x16x128xf32>
    %52 = tpu.matmul %1, %51, %cst_25 {dimension_numbers = #tpu.dot_dimension_numbers<[2], [1], [1], [2], [0, 0, 0, 1, 1, 2], [0], [0]>} : vector<2x16x16xbf16>, vector<2x16x128xbf16>, vector<2x16x128xf32> -> vector<2x16x128xf32>
    "tpu.trace_stop"() : () -> ()
    %53 = vector.broadcast %40 : vector<2x16x1xf32> to vector<2x16x128xf32>
    %54 = arith.mulf %52, %53 : vector<2x16x128xf32>
    %c0_26 = arith.constant 0 : index
    %c0_27 = arith.constant 0 : index
    %55 = vector.load %arg7[%c0_26, %c0_27] : memref<1x128xf32, #tpu.memory_space<vmem>>, vector<1x128xf32>
    %56 = vector.shape_cast %55 : vector<1x128xf32> to vector<1x1x128xf32>
    %57 = vector.broadcast %56 : vector<1x1x128xf32> to vector<2x16x128xf32>
    %58 = arith.addf %54, %57 : vector<2x16x128xf32>
    %c0_28 = arith.constant 0 : index
    %c0_29 = arith.constant 0 : index
    %c0_30 = arith.constant 0 : index
    %59 = vector.load %arg8[%c0_28, %c0_29, %c0_30] : memref<2x16x128xf32, #tpu.memory_space<vmem>>, vector<2x16x128xf32>
    tpu.vector_store %arg8[%c0_28, %c0_29, %c0_30], %58 {strides = array<i32>} : memref<2x16x128xf32, #tpu.memory_space<vmem>>, vector<2x16x128xf32>,
    return
  }
  func.func @transform_0(%arg0: i32) -> (i32, i32, i32) {
    %c0_i32 = arith.constant 0 : i32
    %c0_i32_0 = arith.constant 0 : i32
    %c0_i32_1 = arith.constant 0 : i32
    return %arg0, %c0_i32, %c0_i32_0 : i32, i32, i32
  }
  func.func @transform_1(%arg0: i32) -> (i32, i32, i32) {
    %c0_i32 = arith.constant 0 : i32
    %c0_i32_0 = arith.constant 0 : i32
    %c0_i32_1 = arith.constant 0 : i32
    return %arg0, %c0_i32, %c0_i32_0 : i32, i32, i32
  }
  func.func @transform_2(%arg0: i32) -> (i32, i32, i32) {
    %c0_i32 = arith.constant 0 : i32
    %c0_i32_0 = arith.constant 0 : i32
    %c0_i32_1 = arith.constant 0 : i32
    return %arg0, %c0_i32, %c0_i32_0 : i32, i32, i32
  }
  func.func @transform_3(%arg0: i32) -> (i32, i32) {
    %c0_i32 = arith.constant 0 : i32
    %c0_i32_0 = arith.constant 0 : i32
    %c0_i32_1 = arith.constant 0 : i32
    return %c0_i32, %c0_i32_0 : i32, i32
  }
  func.func @transform_4(%arg0: i32) -> (i32, i32) {
    %c0_i32 = arith.constant 0 : i32
    %c0_i32_0 = arith.constant 0 : i32
    %c0_i32_1 = arith.constant 0 : i32
    return %c0_i32, %c0_i32_0 : i32, i32
  }
  func.func @transform_5(%arg0: i32) -> (i32, i32) {
    %c0_i32 = arith.constant 0 : i32
    %c0_i32_0 = arith.constant 0 : i32
    %c0_i32_1 = arith.constant 0 : i32
    return %c0_i32, %c0_i32_0 : i32, i32
  }
  func.func @transform_6(%arg0: i32) -> (i32, i32) {
    %c0_i32 = arith.constant 0 : i32
    %c0_i32_0 = arith.constant 0 : i32
    %c0_i32_1 = arith.constant 0 : i32
    return %c0_i32, %c0_i32_0 : i32, i32
  }
  func.func @transform_7(%arg0: i32) -> (i32, i32, i32) {
    %c0_i32 = arith.constant 0 : i32
    %c0_i32_0 = arith.constant 0 : i32
    %c0_i32_1 = arith.constant 0 : i32
    return %arg0, %c0_i32, %c0_i32_0 : i32, i32, i32
  }
}

</mosaic_0001>

<llo_original>
// kernel: tpu_custom_call.1
$region0: #{tpu_custom_call.1}
  #allocation0 [shape = 'u32[]', space=smem, size = 0x4, offset = 0x4, fixed_abs, tag = 'smem constant byte address 0x4 - core index']
  #allocation1 [shape = 'u32[144,128]{1,0:T(1,128)}', space=vmem, size = 0x12000, scoped, tag = 'internal scratch']
  %s0 = inlined_call_operand.vmem [shape: bf16[4,16,32], index: 0, kind: input, shape index: {}]
  %s1 = inlined_call_operand.vmem [shape: bf16[4,16,16], index: 1, kind: input, shape index: {}]
  %s2 = inlined_call_operand.vmem [shape: f32[4,32,16], index: 2, kind: input, shape index: {}]
  %s3 = inlined_call_operand.vmem [shape: bf16[16,64], index: 3, kind: input, shape index: {}]
  %s4 = inlined_call_operand.vmem [shape: f32[1,64], index: 4, kind: input, shape index: {}]
  %s5 = inlined_call_operand.vmem [shape: bf16[64,128], index: 5, kind: input, shape index: {}]
  %s6 = inlined_call_operand.vmem [shape: f32[1,128], index: 6, kind: input, shape index: {}]
  %s7 = inlined_call_operand.hbm [shape: f32[4,16,128], index: 7, kind: output, shape index: {}]
  %s8 = sld [smem:[#allocation0]]
  $region61: #{tpu_custom_call.1} parent=0
    _
  %s10 = ssub.s32 1, %s8
  %s11 = scalar_select 0, %s10, %s8
  $region1: #{tpu_custom_call.1} parent=0
    #allocation2 [shape = 'u8[32768]{0}', space=vmem, size = 0x8000, scoped, tag = 'output window, operand 0']
    #allocation3 [shape = 's32[2]{0}', space=sflag, size = 0x8, scoped, tag = 'scoped memory for tpu_custom_call.1']
    %12 = vsyncpa [#allocation3], 0
    %s13 = scalar_lea.sflag [#allocation3], 1
    %14 = vsyncpa %s13, 0
    loop: start=0, step=1, limit=4
    $region2: #{tpu_custom_call.1} parent=1 // loop_pre_header
      _
    $region3: #{tpu_custom_call.1} parent=1 // loop_header
      %s16 = sphi 0, %s20
      %p17 = scmp.ge.s32.totalorder %s16, 4
      %s26 = sphi 0, %s28
      %s29 = sphi 0, %s26
      %s30 = sphi 0, %s29
      %s46 = sphi 0, %s30
      %s52 = sphi 0, %s54
      %s55 = sphi 0, %s52
      %s56 = sphi 0, %s55
      %s72 = sphi 0, %s56
      %s78 = sphi 0, %s80
      %s81 = sphi 0, %s78
      %s82 = sphi 0, %s81
      %s98 = sphi 0, %s82
      %s102 = sphi 0, %s102
      %s104 = sphi 0, %s102
      %s105 = sphi 0, %s104
      %s119 = sphi 0, %s105
      %s123 = sphi 0, %s123
      %s125 = sphi 0, %s123
      %s126 = sphi 0, %s125
      %s140 = sphi 0, %s126
      %s144 = sphi 0, %s144
      %s146 = sphi 0, %s144
      %s147 = sphi 0, %s146
      %s161 = sphi 0, %s147
      %s165 = sphi 0, %s165
      %s167 = sphi 0, %s165
      %s168 = sphi 0, %s167
      %s182 = sphi 0, %s168
      %s188 = sphi 0, %s190
      %s191 = sphi 0, %s188
      %s192 = sphi 0, %s191
      %s208 = sphi 0, %s192
    $region4: #{tpu_custom_call.1} parent=1 // loop_header_branch
      %19 = sbr.rel (%p17) target = $region8
    $region5: #{tpu_custom_call.1} parent=1 // loop_body
      %s21 = ssub.s32 %s16, 1
      %s22 = ssub.s32 %s16, 2
      %s23 = sadd.s32 %s16, 1
      %s24 = ssub.s32 %s16, %s23
      %p25 = scmp.eq.s32.totalorder %s24, 0
      %s27 = sadd.s32 %s26, 1
      %s28 = scalar_select %p25, %s26, %s27
      %p31 = pneg %p25
      %p32 = scmp.eq.s32.totalorder %s16, 1
      %p33 = por %p31, %p32
      %p34 = scmp.ne.s32.totalorder %s26, %s29
      %p35 = scmp.eq.s32.totalorder %s16, 0
      %p36 = por %p34, %p35
      %p37 = scmp.ne.s32.totalorder %s26, %s29
      %p38 = scmp.eq.s32.totalorder %s21, 1
      %p39 = por %p37, %p38
      %p40 = scmp.ne.s32.totalorder %s29, %s30
      %p41 = scmp.eq.s32.totalorder %s21, 0
      %p42 = por %p40, %p41
      %p43 = scmp.ne.s32.totalorder %s29, %s30
      %p44 = scmp.eq.s32.totalorder %s22, 1
      %p45 = por %p43, %p44
      %p47 = scmp.ne.s32.totalorder %s30, %s46
      %p48 = scmp.eq.s32.totalorder %s22, 0
      %p49 = por %p47, %p48
      %s50 = ssub.s32 %s16, %s23
      %p51 = scmp.eq.s32.totalorder %s50, 0
      %s53 = sadd.s32 %s52, 1
      %s54 = scalar_select %p51, %s52, %s53
      %p57 = pneg %p51
      %p58 = scmp.eq.s32.totalorder %s16, 1
      %p59 = por %p57, %p58
      %p60 = scmp.ne.s32.totalorder %s52, %s55
      %p61 = scmp.eq.s32.totalorder %s16, 0
      %p62 = por %p60, %p61
      %p63 = scmp.ne.s32.totalorder %s52, %s55
      %p64 = scmp.eq.s32.totalorder %s21, 1
      %p65 = por %p63, %p64
      %p66 = scmp.ne.s32.totalorder %s55, %s56
      %p67 = scmp.eq.s32.totalorder %s21, 0
      %p68 = por %p66, %p67
      %p69 = scmp.ne.s32.totalorder %s55, %s56
      %p70 = scmp.eq.s32.totalorder %s22, 1
      %p71 = por %p69, %p70
      %p73 = scmp.ne.s32.totalorder %s56, %s72
      %p74 = scmp.eq.s32.totalorder %s22, 0
      %p75 = por %p73, %p74
      %s76 = ssub.s32 %s16, %s23
      %p77 = scmp.eq.s32.totalorder %s76, 0
      %s79 = sadd.s32 %s78, 1
      %s80 = scalar_select %p77, %s78, %s79
      %p83 = pneg %p77
      %p84 = scmp.eq.s32.totalorder %s16, 1
      %p85 = por %p83, %p84
      %p86 = scmp.ne.s32.totalorder %s78, %s81
      %p87 = scmp.eq.s32.totalorder %s16, 0
      %p88 = por %p86, %p87
      %p89 = scmp.ne.s32.totalorder %s78, %s81
      %p90 = scmp.eq.s32.totalorder %s21, 1
      %p91 = por %p89, %p90
      %p92 = scmp.ne.s32.totalorder %s81, %s82
      %p93 = scmp.eq.s32.totalorder %s21, 0
      %p94 = por %p92, %p93
      %p95 = scmp.ne.s32.totalorder %s81, %s82
      %p96 = scmp.eq.s32.totalorder %s22, 1
      %p97 = por %p95, %p96
      %p99 = scmp.ne.s32.totalorder %s82, %s98
      %p100 = scmp.eq.s32.totalorder %s22, 0
      %p101 = por %p99, %p100
      %s103 = sadd.s32 %s102, 1
      %p106 = scmp.eq.s32.totalorder %s16, 1
      %p107 = scmp.ne.s32.totalorder %s102, %s104
      %p108 = scmp.eq.s32.totalorder %s16, 0
      %p109 = por %p107, %p108
      %p110 = scmp.ne.s32.totalorder %s102, %s104
      %p111 = scmp.eq.s32.totalorder %s21, 1
      %p112 = por %p110, %p111
      %p113 = scmp.ne.s32.totalorder %s104, %s105
      %p114 = scmp.eq.s32.totalorder %s21, 0
      %p115 = por %p113, %p114
      %p116 = scmp.ne.s32.totalorder %s104, %s105
      %p117 = scmp.eq.s32.totalorder %s22, 1
      %p118 = por %p116, %p117
      %p120 = scmp.ne.s32.totalorder %s105, %s119
      %p121 = scmp.eq.s32.totalorder %s22, 0
      %p122 = por %p120, %p121
      %s124 = sadd.s32 %s123, 1
      %p127 = scmp.eq.s32.totalorder %s16, 1
      %p128 = scmp.ne.s32.totalorder %s123, %s125
      %p129 = scmp.eq.s32.totalorder %s16, 0
      %p130 = por %p128, %p129
      %p131 = scmp.ne.s32.totalorder %s123, %s125
      %p132 = scmp.eq.s32.totalorder %s21, 1
      %p133 = por %p131, %p132
      %p134 = scmp.ne.s32.totalorder %s125, %s126
      %p135 = scmp.eq.s32.totalorder %s21, 0
      %p136 = por %p134, %p135
      %p137 = scmp.ne.s32.totalorder %s125, %s126
      %p138 = scmp.eq.s32.totalorder %s22, 1
      %p139 = por %p137, %p138
      %p141 = scmp.ne.s32.totalorder %s126, %s140
      %p142 = scmp.eq.s32.totalorder %s22, 0
      %p143 = por %p141, %p142
      %s145 = sadd.s32 %s144, 1
      %p148 = scmp.eq.s32.totalorder %s16, 1
      %p149 = scmp.ne.s32.totalorder %s144, %s146
      %p150 = scmp.eq.s32.totalorder %s16, 0
      %p151 = por %p149, %p150
      %p152 = scmp.ne.s32.totalorder %s144, %s146
      %p153 = scmp.eq.s32.totalorder %s21, 1
      %p154 = por %p152, %p153
      %p155 = scmp.ne.s32.totalorder %s146, %s147
      %p156 = scmp.eq.s32.totalorder %s21, 0
      %p157 = por %p155, %p156
      %p158 = scmp.ne.s32.totalorder %s146, %s147
      %p159 = scmp.eq.s32.totalorder %s22, 1
      %p160 = por %p158, %p159
      %p162 = scmp.ne.s32.totalorder %s147, %s161
      %p163 = scmp.eq.s32.totalorder %s22, 0
      %p164 = por %p162, %p163
      %s166 = sadd.s32 %s165, 1
      %p169 = scmp.eq.s32.totalorder %s16, 1
      %p170 = scmp.ne.s32.totalorder %s165, %s167
      %p171 = scmp.eq.s32.totalorder %s16, 0
      %p172 = por %p170, %p171
      %p173 = scmp.ne.s32.totalorder %s165, %s167
      %p174 = scmp.eq.s32.totalorder %s21, 1
      %p175 = por %p173, %p174
      %p176 = scmp.ne.s32.totalorder %s167, %s168
      %p177 = scmp.eq.s32.totalorder %s21, 0
      %p178 = por %p176, %p177
      %p179 = scmp.ne.s32.totalorder %s167, %s168
      %p180 = scmp.eq.s32.totalorder %s22, 1
      %p181 = por %p179, %p180
      %p183 = scmp.ne.s32.totalorder %s168, %s182
      %p184 = scmp.eq.s32.totalorder %s22, 0
      %p185 = por %p183, %p184
      %s186 = ssub.s32 %s16, %s23
      %p187 = scmp.eq.s32.totalorder %s186, 0
      %s189 = sadd.s32 %s188, 1
      %s190 = scalar_select %p187, %s188, %s189
      %p193 = pneg %p187
      %p194 = scmp.eq.s32.totalorder %s16, 1
      %p195 = por %p193, %p194
      %p196 = scmp.ne.s32.totalorder %s188, %s191
      %p197 = scmp.eq.s32.totalorder %s16, 0
      %p198 = por %p196, %p197
      %p199 = scmp.ne.s32.totalorder %s188, %s191
      %p200 = scmp.eq.s32.totalorder %s21, 1
      %p201 = por %p199, %p200
      %p202 = scmp.ne.s32.totalorder %s191, %s192
      %p203 = scmp.eq.s32.totalorder %s21, 0
      %p204 = por %p202, %p203
      %p205 = scmp.ne.s32.totalorder %s191, %s192
      %p206 = scmp.eq.s32.totalorder %s22, 1
      %p207 = por %p205, %p206
      %p209 = scmp.ne.s32.totalorder %s192, %s208
      %p210 = scmp.eq.s32.totalorder %s22, 0
      %p211 = por %p209, %p210
      %p212 = scmp.le.s32.totalorder 1, %s16
      %p213 = scmp.lt.s32.totalorder %s16, 3
      %p214 = pnand %p212, %p213
      %p215 = pneg %p214
      // Predicated region
      $region9: #{tpu_custom_call.1} parent=5 // pred_check
        _
      $region10: #{tpu_custom_call.1} parent=5 // pred_check_branch
        %217 = sbr.rel (%p214) target = $region12
      $region11: #{tpu_custom_call.1} parent=5 // pred_region
        %s218 = ssub.s32 %s16, 1
        // Predicated region
        $region13: #{tpu_custom_call.1} parent=11 // pred_check
          %p219 = pneg %p115
        $region14: #{tpu_custom_call.1} parent=11 // pred_check_branch
          %221 = sbr.rel (%p219) target = $region16
        $region15: #{tpu_custom_call.1} parent=11 // pred_region
          _
        $region16: #{tpu_custom_call.1} parent=11 // pred_fallthru
          _
        // Predicated region
        $region17: #{tpu_custom_call.1} parent=11 // pred_check
          %p222 = pneg %p136
        $region18: #{tpu_custom_call.1} parent=11 // pred_check_branch
          %224 = sbr.rel (%p222) target = $region20
        $region19: #{tpu_custom_call.1} parent=11 // pred_region
          _
        $region20: #{tpu_custom_call.1} parent=11 // pred_fallthru
          _
        // Predicated region
        $region21: #{tpu_custom_call.1} parent=11 // pred_check
          %p225 = pneg %p157
        $region22: #{tpu_custom_call.1} parent=11 // pred_check_branch
          %227 = sbr.rel (%p225) target = $region24
        $region23: #{tpu_custom_call.1} parent=11 // pred_region
          _
        $region24: #{tpu_custom_call.1} parent=11 // pred_fallthru
          _
        // Predicated region
        $region25: #{tpu_custom_call.1} parent=11 // pred_check
          %p228 = pneg %p178
        $region26: #{tpu_custom_call.1} parent=11 // pred_check_branch
          %230 = sbr.rel (%p228) target = $region28
        $region27: #{tpu_custom_call.1} parent=11 // pred_region
          _
        $region28: #{tpu_custom_call.1} parent=11 // pred_fallthru
          _
      $region12: #{tpu_custom_call.1} parent=5 // pred_fallthru
        _
      %p231 = scmp.lt.s32.totalorder %s16, 2
      // Predicated region
      $region29: #{tpu_custom_call.1} parent=5 // pred_check
        %p232 = pneg %p231
      $region30: #{tpu_custom_call.1} parent=5 // pred_check_branch
        %234 = sbr.rel (%p232) target = $region32
      $region31: #{tpu_custom_call.1} parent=5 // pred_region
        // Predicated region
        $region33: #{tpu_custom_call.1} parent=31 // pred_check
          %p235 = pneg %p36
        $region34: #{tpu_custom_call.1} parent=31 // pred_check_branch
          %237 = sbr.rel (%p235) target = $region36
        $region35: #{tpu_custom_call.1} parent=31 // pred_region
          %s238 = smul.u32 2, %s16
          %p239 = scmp.lt.s32.totalorder %s238, 3
          %s240 = scalar_select %p239, %s238, 3
          %s241 = smul.addr %s240, 2
          %s242 = smul.addr %s241, 4
          %s243 = scalar_lea.vmem %s0, %s242
          %s244 = smul.u32 2, %s16
        $region36: #{tpu_custom_call.1} parent=31 // pred_fallthru
          _
        // Predicated region
        $region37: #{tpu_custom_call.1} parent=31 // pred_check
          %p245 = pneg %p62
        $region38: #{tpu_custom_call.1} parent=31 // pred_check_branch
          %247 = sbr.rel (%p245) target = $region40
        $region39: #{tpu_custom_call.1} parent=31 // pred_region
          %s248 = smul.u32 2, %s16
          %p249 = scmp.lt.s32.totalorder %s248, 3
          %s250 = scalar_select %p249, %s248, 3
          %s251 = smul.addr %s250, 2
          %s252 = smul.addr %s251, 4
          %s253 = scalar_lea.vmem %s1, %s252
          %s254 = smul.u32 2, %s16
        $region40: #{tpu_custom_call.1} parent=31 // pred_fallthru
          _
        // Predicated region
        $region41: #{tpu_custom_call.1} parent=31 // pred_check
          %p255 = pneg %p88
        $region42: #{tpu_custom_call.1} parent=31 // pred_check_branch
          %257 = sbr.rel (%p255) target = $region44
        $region43: #{tpu_custom_call.1} parent=31 // pred_region
          %s258 = smul.u32 2, %s16
          %p259 = scmp.lt.s32.totalorder %s258, 3
          %s260 = scalar_select %p259, %s258, 3
          %s261 = smul.addr %s260, 4
          %s262 = smul.addr %s261, 8
          %s263 = scalar_lea.vmem %s2, %s262
          %s264 = smul.u32 2, %s16
        $region44: #{tpu_custom_call.1} parent=31 // pred_fallthru
          _
      $region32: #{tpu_custom_call.1} parent=5 // pred_fallthru
        _
      %p265 = scmp.le.s32.totalorder 1, %s16
      %p266 = scmp.lt.s32.totalorder %s16, 3
      %p267 = pnand %p265, %p266
      %p268 = pneg %p267
      // Predicated region
      $region45: #{tpu_custom_call.1} parent=5 // pred_check
        _
      $region46: #{tpu_custom_call.1} parent=5 // pred_check_branch
        %270 = sbr.rel (%p267) target = $region48
      $region47: #{tpu_custom_call.1} parent=5 // pred_region
        %s271 = ssub.s32 %s16, 1
        %s272 = smul.u32 2, %s21
        %p273 = scmp.lt.s32.totalorder %s272, 3
        %s274 = scalar_select %p273, %s272, 3
        %s275 = smul.addr %s274, 2
        %s276 = smul.addr %s275, 4
        %s277 = scalar_lea.vmem %s0, %s276
        %p278 = pneg %p42
        %p279 = pneg %p39
        %s280 = smul.u32 2, %s21
        %p281 = scmp.lt.s32.totalorder %s280, 3
        %s282 = scalar_select %p281, %s280, 3
        %s283 = smul.addr %s282, 2
        %s284 = smul.addr %s283, 4
        %s285 = scalar_lea.vmem %s1, %s284
        %p286 = pneg %p68
        %p287 = pneg %p65
        %s288 = smul.u32 2, %s21
        %p289 = scmp.lt.s32.totalorder %s288, 3
        %s290 = scalar_select %p289, %s288, 3
        %s291 = smul.addr %s290, 4
        %s292 = smul.addr %s291, 8
        %s293 = scalar_lea.vmem %s2, %s292
        %p294 = pneg %p94
        %p295 = pneg %p91
        %p296 = pneg %p115
        %p297 = pneg %p112
        %p298 = pneg %p136
        %p299 = pneg %p133
        %p300 = pneg %p157
        %p301 = pneg %p154
        %p302 = pneg %p178
        %p303 = pneg %p175
        %p304 = pneg %p204
        %p305 = pneg %p201
        %s306 = sand.u32 %s191, 1
        %s307 = scalar_lea.sflag [#allocation3], %s306
        %s308 = sand.u32 %s191, 1
        %s309 = smul.addr %s308, 32
        %s310 = scalar_lea.vmem [#allocation2], %s309
        %s311 = smul.u32 2, %s21
        %p312 = scmp.lt.s32.totalorder %s311, 3
        %s313 = scalar_select %p312, %s311, 3
        %s314 = smul.addr %s313, 2
        %s315 = smul.addr %s314, 4
        %s316 = scalar_lea.vmem %s0, %s315
        %s317 = smul.u32 2, %s21
        %s318 = smul.u32 2, %s21
        %p319 = scmp.lt.s32.totalorder %s318, 3
        %s320 = scalar_select %p319, %s318, 3
        %s321 = smul.addr %s320, 2
        %s322 = smul.addr %s321, 4
        %s323 = scalar_lea.vmem %s1, %s322
        %s324 = smul.u32 2, %s21
        %s325 = smul.u32 2, %s21
        %p326 = scmp.lt.s32.totalorder %s325, 3
        %s327 = scalar_select %p326, %s325, 3
        %s328 = smul.addr %s327, 4
        %s329 = smul.addr %s328, 8
        %s330 = scalar_lea.vmem %s2, %s329
        %s331 = smul.u32 2, %s21
        %s332 = smul.u32 2, %s21
        %v334 = vld [vmem:[%s316] sm:$0xf]
        %v335 = vld [vmem:[%s316 + $0x4] sm:$0xf]
        %v336 = vld [vmem:[%s316 + $0x8] sm:$0xf]
        %v337 = vld [vmem:[%s316 + $0xc] sm:$0xf]
        %v338 = vld [vmem:[%s323] sm:$0xf]
        %v339 = vld [vmem:[%s323 + $0x4] sm:$0xf]
        %v340 = vld [vmem:[%s323 + $0x8] sm:$0xf]
        %v341 = vld [vmem:[%s323 + $0xc] sm:$0xf]
        %v342 = vld [vmem:[%s330] sm:$0xff]
        %v343 = vld [vmem:[%s330 + $0x8] sm:$0xff]
        %v344 = vld [vmem:[%s330 + $0x10] sm:$0xff]
        %v345 = vld [vmem:[%s330 + $0x18] sm:$0xff]
        %v346 = vld [vmem:[%s330 + $0x20] sm:$0xff]
        %v347 = vld [vmem:[%s330 + $0x28] sm:$0xff]
        %v348 = vld [vmem:[%s330 + $0x30] sm:$0xff]
        %v349 = vld [vmem:[%s330 + $0x38] sm:$0xff]
        %v350 = vunpack.c.l.bf16 %v334
        %v351 = vunpack.c.l.bf16 %v335
        %v352 = vunpack.c.l.bf16 %v336
        %v353 = vunpack.c.l.bf16 %v337
        %vm354 = vcmask 261120
        %v355 = vsel %vm354, %v350, 0.0
        %356 = vadd.xlane.f32.xlu0 %v355
        %v357 = vpop.xlane.xlu0 %356
        %v358 = vsel %vm354, %v351, 0.0
        %359 = vadd.xlane.f32.xlu0 %v358
        %v360 = vpop.xlane.xlu0 %359
        %v361 = vsel %vm354, %v352, 0.0
        %362 = vadd.xlane.f32.xlu0 %v361
        %v363 = vpop.xlane.xlu0 %362
        %v364 = vsel %vm354, %v353, 0.0
        %365 = vadd.xlane.f32.xlu0 %v364
        %v366 = vpop.xlane.xlu0 %365
        %v367 = vadd.f32 %v355, %v358
        %v368 = vrot.slane %v367, 4
        %v369 = vadd.f32 %v367, %v368
        %v370 = vrot.slane %v369, 2
        %v371 = vadd.f32 %v369, %v370
        %v372 = vrot.slane %v371, 1
        %v373 = vadd.f32 %v371, %v372
        %v374 = vadd.f32 %v361, %v364
        %v375 = vrot.slane %v374, 4
        %v376 = vadd.f32 %v374, %v375
        %v377 = vrot.slane %v376, 2
        %v378 = vadd.f32 %v376, %v377
        %v379 = vrot.slane %v378, 1
        %v380 = vadd.f32 %v378, %v379
        %382 = vbcast.lane.b32.xlu0 %v373, 256
        %v383 = vpop.permute.xlu0 %382
        %s385 = sor.u32 256, 8
        %386 = vbcast.lane.b32.xlu0 %v373, %s385
        %v387 = vpop.permute.xlu0 %386
        %s389 = sor.u32 256, 16
        %390 = vbcast.lane.b32.xlu0 %v373, %s389
        %v391 = vpop.permute.xlu0 %390
        %s393 = sor.u32 256, 24
        %394 = vbcast.lane.b32.xlu0 %v373, %s393
        %v395 = vpop.permute.xlu0 %394
        %397 = vbcast.lane.b32.xlu0 %v380, 256
        %v398 = vpop.permute.xlu0 %397
        %s400 = sor.u32 256, 8
        %401 = vbcast.lane.b32.xlu0 %v380, %s400
        %v402 = vpop.permute.xlu0 %401
        %s404 = sor.u32 256, 16
        %405 = vbcast.lane.b32.xlu0 %v380, %s404
        %v406 = vpop.permute.xlu0 %405
        %s408 = sor.u32 256, 24
        %409 = vbcast.lane.b32.xlu0 %v380, %s408
        %v410 = vpop.permute.xlu0 %409
        %v411 = vmax.f32 %v357, 1.0
        %v412 = vmax.f32 %v360, 1.0
        %v413 = vmax.f32 %v363, 1.0
        %v414 = vmax.f32 %v366, 1.0
        %v415 = vrsqrt.pop %v411
        %v416 = vrsqrt.pop %v412
        %v417 = vrsqrt.pop %v413
        %v418 = vrsqrt.pop %v414
        %v419 = vmax.f32 %v383, 1.0
        %v420 = vmax.f32 %v387, 1.0
        %v421 = vmax.f32 %v391, 1.0
        %v422 = vmax.f32 %v395, 1.0
        %v423 = vmax.f32 %v398, 1.0
        %v424 = vmax.f32 %v402, 1.0
        %v425 = vmax.f32 %v406, 1.0
        %v426 = vmax.f32 %v410, 1.0
        %v427 = vrsqrt.pop %v419
        %v428 = vrsqrt.pop %v420
        %v429 = vrsqrt.pop %v421
        %v430 = vrsqrt.pop %v422
        %v431 = vrsqrt.pop %v423
        %v432 = vrsqrt.pop %v424
        %v433 = vrsqrt.pop %v425
        %v434 = vrsqrt.pop %v426
        %v435 = vmul.f32 %v342, %v427
        %v436 = vmul.f32 %v343, %v428
        %v437 = vmul.f32 %v344, %v429
        %v438 = vmul.f32 %v345, %v430
        %v439 = vmul.f32 %v346, %v431
        %v440 = vmul.f32 %v347, %v432
        %v441 = vmul.f32 %v348, %v433
        %v442 = vmul.f32 %v349, %v434
        %v443 = vpack.c.bf16 %v436, %v435
        %v444 = vpack.c.bf16 %v438, %v437
        %v445 = vpack.c.bf16 %v440, %v439
        %v446 = vpack.c.bf16 %v442, %v441
        %v447 = vld [vmem:[%s3] sm:$0xf]
        %v448 = vld [vmem:[%s3 + $0x4] sm:$0xf]
        %v451 = vunpack.c.l.b16 %v447
        %v452 = vunpack.c.l.b16 %v448
        %v453 = vpack.c.b16 %v452, %v451
        %vm455 = vcmask 130048
        %v457 = vsel %vm455, %v443, 0
        %v460 = vsel %vm455, %v444, 0
        %v463 = vsel %vm455, %v445, 0
        %v466 = vsel %vm455, %v446, 0
        %468 = vmatprep.subr.bf16.mxu0 0
        %469 = vmatpush1.bf16.msra.mxu0 %v453
        %470 = vmatprep.subr.bf16.mxu0 0
        %471 = vmatpush1.bf16.msra.mxu0 0
        %472 = vmatprep.subr.bf16.mxu0 0
        %473 = vmatpush1.bf16.msra.mxu0 0
        %474 = vmatprep.subr.bf16.mxu0 0
        %475 = vmatpush1.bf16.msra.mxu0 0
        %476 = vmatprep.subr.bf16.mxu0 0
        %477 = vmatpush1.bf16.msra.mxu0 0
        %478 = vmatprep.subr.bf16.mxu0 0
        %479 = vmatpush1.bf16.msra.mxu0 0
        %480 = vmatprep.subr.bf16.mxu0 0
        %481 = vmatpush1.bf16.msra.mxu0 0
        %482 = vmatprep.subr.bf16.mxu0 0
        %483 = vmatpush1.bf16.msra.mxu0 0
        %484 = vmatprep.subr.bf16.mxu0 0
        %485 = vmatpush1.bf16.msra.mxu0 0
        %486 = vmatprep.subr.bf16.mxu0 0
        %487 = vmatpush1.bf16.msra.mxu0 0
        %488 = vmatprep.subr.bf16.mxu0 0
        %489 = vmatpush1.bf16.msra.mxu0 0
        %490 = vmatprep.subr.bf16.mxu0 0
        %491 = vmatpush1.bf16.msra.mxu0 0
        %492 = vmatprep.subr.bf16.mxu0 0
        %493 = vmatpush1.bf16.msra.mxu0 0
        %494 = vmatprep.subr.bf16.mxu0 0
        %495 = vmatpush1.bf16.msra.mxu0 0
        %496 = vmatprep.subr.bf16.mxu0 0
        %497 = vmatpush1.bf16.msra.mxu0 0
        %498 = vmatprep.subr.bf16.mxu0 0
        %499 = vmatpush1.bf16.msra.mxu0 0
        %500 = vmatprep.mubr.bf16.mxu0 0
        %501 = vmatmul.mubr.bf16.gmra.mrb[0].mxu0 %v457
        %v502 = vpop.f32.mrb[0].mxu0
        %v503 = vadd.f32 0.0, %v502
        %v504 = vpop.f32.mrb[0].mxu0
        %v505 = vpop.f32.mrb[0].mxu0
        %v506 = vadd.f32 0.0, %v505
        %v507 = vpop.f32.mrb[0].mxu0
        %508 = vmatprep.mubr.bf16.mxu0 0
        %509 = vmatmul.mubr.bf16.gmra.mrb[0].mxu0 %v460
        %v510 = vpop.f32.mrb[0].mxu0
        %v511 = vadd.f32 0.0, %v510
        %v512 = vpop.f32.mrb[0].mxu0
        %v513 = vpop.f32.mrb[0].mxu0
        %v514 = vadd.f32 0.0, %v513
        %v515 = vpop.f32.mrb[0].mxu0
        %516 = vmatprep.mubr.bf16.mxu0 0
        %517 = vmatmul.mubr.bf16.gmra.mrb[0].mxu0 %v463
        %v518 = vpop.f32.mrb[0].mxu0
        %v519 = vadd.f32 0.0, %v518
        %v520 = vpop.f32.mrb[0].mxu0
        %v521 = vpop.f32.mrb[0].mxu0
        %v522 = vadd.f32 0.0, %v521
        %v523 = vpop.f32.mrb[0].mxu0
        %524 = vmatprep.mubr.bf16.mxu0 0
        %525 = vmatmul.mubr.bf16.gmra.mrb[0].mxu0 %v466
        %v526 = vpop.f32.mrb[0].mxu0
        %v527 = vadd.f32 0.0, %v526
        %v528 = vpop.f32.mrb[0].mxu0
        %v529 = vpop.f32.mrb[0].mxu0
        %v530 = vadd.f32 0.0, %v529
        %v531 = vpop.f32.mrb[0].mxu0
        %532 = vdwg.mxu0
        %v533 = vpack.c.bf16 %v506, %v503
        %v534 = vpack.c.bf16 %v514, %v511
        %v535 = vpack.c.bf16 %v522, %v519
        %v536 = vpack.c.bf16 %v530, %v527
        %v539 = vunpack.c.l.b16 %v334
        %v540 = vunpack.c.l.b16 %v335
        %v541 = vpack.c.b16 %v540, %v539
        %v543 = vsel %vm354, %v541, 0
        %545 = vmatprep.subr.bf16.mxu0 0
        %546 = vmatpush1.bf16.msra.mxu0 %v533
        %547 = vmatprep.subr.bf16.mxu0 0
        %548 = vmatpush1.bf16.msra.mxu0 %v534
        %549 = vmatprep.subr.bf16.mxu0 0
        %550 = vmatpush1.bf16.msra.mxu0 0
        %551 = vmatprep.subr.bf16.mxu0 0
        %552 = vmatpush1.bf16.msra.mxu0 0
        %553 = vmatprep.subr.bf16.mxu0 0
        %554 = vmatpush1.bf16.msra.mxu0 0
        %555 = vmatprep.subr.bf16.mxu0 0
        %556 = vmatpush1.bf16.msra.mxu0 0
        %557 = vmatprep.subr.bf16.mxu0 0
        %558 = vmatpush1.bf16.msra.mxu0 0
        %559 = vmatprep.subr.bf16.mxu0 0
        %560 = vmatpush1.bf16.msra.mxu0 0
        %561 = vmatprep.subr.bf16.mxu0 0
        %562 = vmatpush1.bf16.msra.mxu0 0
        %563 = vmatprep.subr.bf16.mxu0 0
        %564 = vmatpush1.bf16.msra.mxu0 0
        %565 = vmatprep.subr.bf16.mxu0 0
        %566 = vmatpush1.bf16.msra.mxu0 0
        %567 = vmatprep.subr.bf16.mxu0 0
        %568 = vmatpush1.bf16.msra.mxu0 0
        %569 = vmatprep.subr.bf16.mxu0 0
        %570 = vmatpush1.bf16.msra.mxu0 0
        %571 = vmatprep.subr.bf16.mxu0 0
        %572 = vmatpush1.bf16.msra.mxu0 0
        %573 = vmatprep.subr.bf16.mxu0 0
        %574 = vmatpush1.bf16.msra.mxu0 0
        %575 = vmatprep.subr.bf16.mxu0 0
        %576 = vmatpush1.bf16.msra.mxu0 0
        %577 = vmatprep.mubr.bf16.mxu0 0
        %578 = vmatmul.mubr.bf16.gmra.mrb[0].mxu0 %v543
        %v579 = vpop.f32.mrb[0].mxu0
        %v580 = vadd.f32 0.0, %v579
        %v581 = vpop.f32.mrb[0].mxu0
        %v582 = vpop.f32.mrb[0].mxu0
        %v583 = vadd.f32 0.0, %v582
        %v584 = vpop.f32.mrb[0].mxu0
        %585 = vdwg.mxu0
        %v588 = vunpack.c.l.b16 %v336
        %v589 = vunpack.c.l.b16 %v337
        %v590 = vpack.c.b16 %v589, %v588
        %v592 = vsel %vm354, %v590, 0
        %594 = vmatprep.subr.bf16.mxu0 0
        %595 = vmatpush1.bf16.msra.mxu0 %v535
        %596 = vmatprep.subr.bf16.mxu0 0
        %597 = vmatpush1.bf16.msra.mxu0 %v536
        %598 = vmatprep.subr.bf16.mxu0 0
        %599 = vmatpush1.bf16.msra.mxu0 0
        %600 = vmatprep.subr.bf16.mxu0 0
        %601 = vmatpush1.bf16.msra.mxu0 0
        %602 = vmatprep.subr.bf16.mxu0 0
        %603 = vmatpush1.bf16.msra.mxu0 0
        %604 = vmatprep.subr.bf16.mxu0 0
        %605 = vmatpush1.bf16.msra.mxu0 0
        %606 = vmatprep.subr.bf16.mxu0 0
        %607 = vmatpush1.bf16.msra.mxu0 0
        %608 = vmatprep.subr.bf16.mxu0 0
        %609 = vmatpush1.bf16.msra.mxu0 0
        %610 = vmatprep.subr.bf16.mxu0 0
        %611 = vmatpush1.bf16.msra.mxu0 0
        %612 = vmatprep.subr.bf16.mxu0 0
        %613 = vmatpush1.bf16.msra.mxu0 0
        %614 = vmatprep.subr.bf16.mxu0 0
        %615 = vmatpush1.bf16.msra.mxu0 0
        %616 = vmatprep.subr.bf16.mxu0 0
        %617 = vmatpush1.bf16.msra.mxu0 0
        %618 = vmatprep.subr.bf16.mxu0 0
        %619 = vmatpush1.bf16.msra.mxu0 0
        %620 = vmatprep.subr.bf16.mxu0 0
        %621 = vmatpush1.bf16.msra.mxu0 0
        %622 = vmatprep.subr.bf16.mxu0 0
        %623 = vmatpush1.bf16.msra.mxu0 0
        %624 = vmatprep.subr.bf16.mxu0 0
        %625 = vmatpush1.bf16.msra.mxu0 0
        %626 = vmatprep.mubr.bf16.mxu0 0
        %627 = vmatmul.mubr.bf16.gmra.mrb[0].mxu0 %v592
        %v628 = vpop.f32.mrb[0].mxu0
        %v629 = vadd.f32 0.0, %v628
        %v630 = vpop.f32.mrb[0].mxu0
        %v631 = vpop.f32.mrb[0].mxu0
        %v632 = vadd.f32 0.0, %v631
        %v633 = vpop.f32.mrb[0].mxu0
        %634 = vdwg.mxu0
        %v635 = vmul.f32 %v580, %v415
        %v636 = vmul.f32 %v583, %v416
        %v637 = vmul.f32 %v629, %v417
        %v638 = vmul.f32 %v632, %v418
        %v639 = vld [vmem:[%s4] sm:$0x1]
        %v641 = vlaneseq
        %v642 = vshrl.u32 %v641, 7
        %v643 = vsub.s32 0, %v642
        %v644 = vrot.slane %v639, %v643
        %v646 = vadd.f32 %v635, %v644
        %v647 = vadd.f32 %v636, %v644
        %v648 = vadd.f32 %v637, %v644
        %v649 = vadd.f32 %v638, %v644
        %v650 = vmax.f32 %v646, 0.0
        %v651 = vmax.f32 %v647, 0.0
        %v652 = vmax.f32 %v648, 0.0
        %v653 = vmax.f32 %v649, 0.0
        %v654 = vunpack.c.l.bf16 %v338
        %v655 = vunpack.c.l.bf16 %v339
        %v656 = vunpack.c.l.bf16 %v340
        %v657 = vunpack.c.l.bf16 %v341
        %v658 = vsel %vm455, %v654, 0.0
        %659 = vadd.xlane.f32.xlu0 %v658
        %v660 = vpop.xlane.xlu0 %659
        %v661 = vsel %vm455, %v655, 0.0
        %662 = vadd.xlane.f32.xlu0 %v661
        %v663 = vpop.xlane.xlu0 %662
        %v664 = vsel %vm455, %v656, 0.0
        %665 = vadd.xlane.f32.xlu0 %v664
        %v666 = vpop.xlane.xlu0 %665
        %v667 = vsel %vm455, %v657, 0.0
        %668 = vadd.xlane.f32.xlu0 %v667
        %v669 = vpop.xlane.xlu0 %668
        %v670 = vadd.f32 %v658, %v661
        %v671 = vrot.slane %v670, 4
        %v672 = vadd.f32 %v670, %v671
        %v673 = vrot.slane %v672, 2
        %v674 = vadd.f32 %v672, %v673
        %v675 = vrot.slane %v674, 1
        %v676 = vadd.f32 %v674, %v675
        %v677 = vadd.f32 %v664, %v667
        %v678 = vrot.slane %v677, 4
        %v679 = vadd.f32 %v677, %v678
        %v680 = vrot.slane %v679, 2
        %v681 = vadd.f32 %v679, %v680
        %v682 = vrot.slane %v681, 1
        %v683 = vadd.f32 %v681, %v682
        %685 = vbcast.lane.b32.xlu0 %v676, 256
        %v686 = vpop.permute.xlu0 %685
        %s688 = sor.u32 256, 8
        %689 = vbcast.lane.b32.xlu0 %v676, %s688
        %v690 = vpop.permute.xlu0 %689
        %692 = vbcast.lane.b32.xlu0 %v683, 256
        %v693 = vpop.permute.xlu0 %692
        %s695 = sor.u32 256, 8
        %696 = vbcast.lane.b32.xlu0 %v683, %s695
        %v697 = vpop.permute.xlu0 %696
        %v698 = vmax.f32 %v660, 1.0
        %v699 = vmax.f32 %v663, 1.0
        %v700 = vmax.f32 %v666, 1.0
        %v701 = vmax.f32 %v669, 1.0
        %v702 = vrsqrt.pop %v698
        %v703 = vrsqrt.pop %v699
        %v704 = vrsqrt.pop %v700
        %v705 = vrsqrt.pop %v701
        %v706 = vmax.f32 %v686, 1.0
        %v707 = vmax.f32 %v690, 1.0
        %v708 = vmax.f32 %v693, 1.0
        %v709 = vmax.f32 %v697, 1.0
        %v710 = vrsqrt.pop %v706
        %v711 = vrsqrt.pop %v707
        %v712 = vrsqrt.pop %v708
        %v713 = vrsqrt.pop %v709
        %v714 = vmul.f32 %v650, %v710
        %v715 = vmul.f32 %v651, %v711
        %v716 = vmul.f32 %v652, %v712
        %v717 = vmul.f32 %v653, %v713
        %v718 = vpack.c.bf16 %v715, %v714
        %v719 = vpack.c.bf16 %v717, %v716
        %v720 = vld [vmem:[%s5] sm:$0xf]
        %v721 = vld [vmem:[%s5 + $0x4] sm:$0xf]
        %v722 = vld [vmem:[%s5 + $0x8] sm:$0xf]
        %v723 = vld [vmem:[%s5 + $0xc] sm:$0xf]
        %v724 = vld [vmem:[%s5 + $0x10] sm:$0xf]
        %v725 = vld [vmem:[%s5 + $0x14] sm:$0xf]
        %v726 = vld [vmem:[%s5 + $0x18] sm:$0xf]
        %v727 = vld [vmem:[%s5 + $0x1c] sm:$0xf]
        %v736 = vunpack.c.l.b16 %v720
        %v737 = vunpack.c.l.b16 %v721
        %v738 = vunpack.c.l.b16 %v722
        %v739 = vunpack.c.l.b16 %v723
        %v740 = vunpack.c.l.b16 %v724
        %v741 = vunpack.c.l.b16 %v725
        %v742 = vunpack.c.l.b16 %v726
        %v743 = vunpack.c.l.b16 %v727
        %v744 = vpack.c.b16 %v737, %v736
        %v745 = vpack.c.b16 %v739, %v738
        %v746 = vpack.c.b16 %v741, %v740
        %v747 = vpack.c.b16 %v743, %v742
        %vm752 = vcmask 523264
        %v754 = vsel %vm752, %v718, 0
        %v757 = vsel %vm752, %v719, 0
        %759 = vmatprep.subr.bf16.mxu0 0
        %760 = vmatpush1.bf16.msra.mxu0 %v744
        %761 = vmatprep.subr.bf16.mxu0 0
        %762 = vmatpush1.bf16.msra.mxu0 %v745
        %763 = vmatprep.subr.bf16.mxu0 0
        %764 = vmatpush1.bf16.msra.mxu0 %v746
        %765 = vmatprep.subr.bf16.mxu0 0
        %766 = vmatpush1.bf16.msra.mxu0 %v747
        %767 = vmatprep.subr.bf16.mxu0 0
        %768 = vmatpush1.bf16.msra.mxu0 0
        %769 = vmatprep.subr.bf16.mxu0 0
        %770 = vmatpush1.bf16.msra.mxu0 0
        %771 = vmatprep.subr.bf16.mxu0 0
        %772 = vmatpush1.bf16.msra.mxu0 0
        %773 = vmatprep.subr.bf16.mxu0 0
        %774 = vmatpush1.bf16.msra.mxu0 0
        %775 = vmatprep.subr.bf16.mxu0 0
        %776 = vmatpush1.bf16.msra.mxu0 0
        %777 = vmatprep.subr.bf16.mxu0 0
        %778 = vmatpush1.bf16.msra.mxu0 0
        %779 = vmatprep.subr.bf16.mxu0 0
        %780 = vmatpush1.bf16.msra.mxu0 0
        %781 = vmatprep.subr.bf16.mxu0 0
        %782 = vmatpush1.bf16.msra.mxu0 0
        %783 = vmatprep.subr.bf16.mxu0 0
        %784 = vmatpush1.bf16.msra.mxu0 0
        %785 = vmatprep.subr.bf16.mxu0 0
        %786 = vmatpush1.bf16.msra.mxu0 0
        %787 = vmatprep.subr.bf16.mxu0 0
        %788 = vmatpush1.bf16.msra.mxu0 0
        %789 = vmatprep.subr.bf16.mxu0 0
        %790 = vmatpush1.bf16.msra.mxu0 0
        %791 = vmatprep.mubr.bf16.mxu0 0
        %792 = vmatmul.mubr.bf16.gmra.mrb[0].mxu0 %v754
        %v793 = vpop.f32.mrb[0].mxu0
        %v794 = vadd.f32 0.0, %v793
        %v795 = vpop.f32.mrb[0].mxu0
        %v796 = vpop.f32.mrb[0].mxu0
        %v797 = vadd.f32 0.0, %v796
        %v798 = vpop.f32.mrb[0].mxu0
        %799 = vmatprep.mubr.bf16.mxu0 0
        %800 = vmatmul.mubr.bf16.gmra.mrb[0].mxu0 %v757
        %v801 = vpop.f32.mrb[0].mxu0
        %v802 = vadd.f32 0.0, %v801
        %v803 = vpop.f32.mrb[0].mxu0
        %v804 = vpop.f32.mrb[0].mxu0
        %v805 = vadd.f32 0.0, %v804
        %v806 = vpop.f32.mrb[0].mxu0
        %807 = vdwg.mxu0
        %v808 = vpack.c.bf16 %v797, %v794
        %v809 = vpack.c.bf16 %v805, %v802
        %v812 = vunpack.c.l.b16 %v338
        %v813 = vunpack.c.l.b16 %v339
        %v814 = vpack.c.b16 %v813, %v812
        %v816 = vsel %vm455, %v814, 0
        %818 = vmatprep.subr.bf16.mxu0 0
        %819 = vmatpush1.bf16.msra.mxu0 %v808
        %820 = vmatprep.subr.bf16.mxu0 0
        %821 = vmatpush1.bf16.msra.mxu0 0
        %822 = vmatprep.subr.bf16.mxu0 0
        %823 = vmatpush1.bf16.msra.mxu0 0
        %824 = vmatprep.subr.bf16.mxu0 0
        %825 = vmatpush1.bf16.msra.mxu0 0
        %826 = vmatprep.subr.bf16.mxu0 0
        %827 = vmatpush1.bf16.msra.mxu0 0
        %828 = vmatprep.subr.bf16.mxu0 0
        %829 = vmatpush1.bf16.msra.mxu0 0
        %830 = vmatprep.subr.bf16.mxu0 0
        %831 = vmatpush1.bf16.msra.mxu0 0
        %832 = vmatprep.subr.bf16.mxu0 0
        %833 = vmatpush1.bf16.msra.mxu0 0
        %834 = vmatprep.subr.bf16.mxu0 0
        %835 = vmatpush1.bf16.msra.mxu0 0
        %836 = vmatprep.subr.bf16.mxu0 0
        %837 = vmatpush1.bf16.msra.mxu0 0
        %838 = vmatprep.subr.bf16.mxu0 0
        %839 = vmatpush1.bf16.msra.mxu0 0
        %840 = vmatprep.subr.bf16.mxu0 0
        %841 = vmatpush1.bf16.msra.mxu0 0
        %842 = vmatprep.subr.bf16.mxu0 0
        %843 = vmatpush1.bf16.msra.mxu0 0
        %844 = vmatprep.subr.bf16.mxu0 0
        %845 = vmatpush1.bf16.msra.mxu0 0
        %846 = vmatprep.subr.bf16.mxu0 0
        %847 = vmatpush1.bf16.msra.mxu0 0
        %848 = vmatprep.subr.bf16.mxu0 0
        %849 = vmatpush1.bf16.msra.mxu0 0
        %850 = vmatprep.mubr.bf16.mxu0 0
        %851 = vmatmul.mubr.bf16.gmra.mrb[0].mxu0 %v816
        %v852 = vpop.f32.mrb[0].mxu0
        %v853 = vadd.f32 0.0, %v852
        %v854 = vpop.f32.mrb[0].mxu0
        %v855 = vpop.f32.mrb[0].mxu0
        %v856 = vadd.f32 0.0, %v855
        %v857 = vpop.f32.mrb[0].mxu0
        %858 = vdwg.mxu0
        %v861 = vunpack.c.l.b16 %v340
        %v862 = vunpack.c.l.b16 %v341
        %v863 = vpack.c.b16 %v862, %v861
        %v865 = vsel %vm455, %v863, 0
        %867 = vmatprep.subr.bf16.mxu0 0
        %868 = vmatpush1.bf16.msra.mxu0 %v809
        %869 = vmatprep.subr.bf16.mxu0 0
        %870 = vmatpush1.bf16.msra.mxu0 0
        %871 = vmatprep.subr.bf16.mxu0 0
        %872 = vmatpush1.bf16.msra.mxu0 0
        %873 = vmatprep.subr.bf16.mxu0 0
        %874 = vmatpush1.bf16.msra.mxu0 0
        %875 = vmatprep.subr.bf16.mxu0 0
        %876 = vmatpush1.bf16.msra.mxu0 0
        %877 = vmatprep.subr.bf16.mxu0 0
        %878 = vmatpush1.bf16.msra.mxu0 0
        %879 = vmatprep.subr.bf16.mxu0 0
        %880 = vmatpush1.bf16.msra.mxu0 0
        %881 = vmatprep.subr.bf16.mxu0 0
        %882 = vmatpush1.bf16.msra.mxu0 0
        %883 = vmatprep.subr.bf16.mxu0 0
        %884 = vmatpush1.bf16.msra.mxu0 0
        %885 = vmatprep.subr.bf16.mxu0 0
        %886 = vmatpush1.bf16.msra.mxu0 0
        %887 = vmatprep.subr.bf16.mxu0 0
        %888 = vmatpush1.bf16.msra.mxu0 0
        %889 = vmatprep.subr.bf16.mxu0 0
        %890 = vmatpush1.bf16.msra.mxu0 0
        %891 = vmatprep.subr.bf16.mxu0 0
        %892 = vmatpush1.bf16.msra.mxu0 0
        %893 = vmatprep.subr.bf16.mxu0 0
        %894 = vmatpush1.bf16.msra.mxu0 0
        %895 = vmatprep.subr.bf16.mxu0 0
        %896 = vmatpush1.bf16.msra.mxu0 0
        %897 = vmatprep.subr.bf16.mxu0 0
        %898 = vmatpush1.bf16.msra.mxu0 0
        %899 = vmatprep.mubr.bf16.mxu0 0
        %900 = vmatmul.mubr.bf16.gmra.mrb[0].mxu0 %v865
        %v901 = vpop.f32.mrb[0].mxu0
        %v902 = vadd.f32 0.0, %v901
        %v903 = vpop.f32.mrb[0].mxu0
        %v904 = vpop.f32.mrb[0].mxu0
        %v905 = vadd.f32 0.0, %v904
        %v906 = vpop.f32.mrb[0].mxu0
        %907 = vdwg.mxu0
        %v908 = vmul.f32 %v853, %v702
        %v909 = vmul.f32 %v856, %v703
        %v910 = vmul.f32 %v902, %v704
        %v911 = vmul.f32 %v905, %v705
        %v912 = vld [vmem:[%s6] sm:$0x1]
        %v914 = vlaneseq
        %v915 = vshrl.u32 %v914, 7
        %v916 = vsub.s32 0, %v915
        %v917 = vrot.slane %v912, %v916
        %v919 = vadd.f32 %v908, %v917
        %v920 = vadd.f32 %v909, %v917
        %v921 = vadd.f32 %v910, %v917
        %v922 = vadd.f32 %v911, %v917
        %923 = vst [vmem:[%s310] sm:$0xff] %v919
        %924 = vst [vmem:[%s310 + $0x8] sm:$0xff] %v920
        %925 = vst [vmem:[%s310 + $0x10] sm:$0xff] %v921
        %926 = vst [vmem:[%s310 + $0x18] sm:$0xff] %v922
        %s927 = sand.u32 %s191, 1
        %s928 = scalar_lea.sflag [#allocation3], %s927
        %s929 = sand.u32 %s191, 1
        %s930 = smul.addr %s929, 32
        %s931 = scalar_lea.vmem [#allocation2], %s930
        // Predicated region
        $region49: #{tpu_custom_call.1} parent=47 // pred_check
          %p932 = pneg %p201
        $region50: #{tpu_custom_call.1} parent=47 // pred_check_branch
          %934 = sbr.rel (%p932) target = $region52
        $region51: #{tpu_custom_call.1} parent=47 // pred_region
          %s935 = smul.u32 2, %s21
          %s937 = ssub.s32 512, 512
          %938 = vsyncadd %s928, %s937
          %s939 = smul.addr %s935, 2
          %s940 = smul.addr %s939, 128
          %s941 = scalar_lea.hbm %s7, %s940
          %s942 = sshll.u32 %s931, 4
          %s943 = int_to_ptr.vmem [resolvable:$true] %s942
          %948 = dma.vmem_to_hbm [thread:$0]  %s943, 512, %s941, %s928, 128, 128, 8
        $region52: #{tpu_custom_call.1} parent=47 // pred_fallthru
          _
      $region48: #{tpu_custom_call.1} parent=5 // pred_fallthru
        _
      %p949 = scmp.le.s32.totalorder 2, %s16
      // Predicated region
      $region53: #{tpu_custom_call.1} parent=5 // pred_check
        %p950 = pneg %p949
      $region54: #{tpu_custom_call.1} parent=5 // pred_check_branch
        %952 = sbr.rel (%p950) target = $region56
      $region55: #{tpu_custom_call.1} parent=5 // pred_region
        %s953 = ssub.s32 %s16, 2
        // Predicated region
        $region57: #{tpu_custom_call.1} parent=55 // pred_check
          %p954 = pneg %p207
        $region58: #{tpu_custom_call.1} parent=55 // pred_check_branch
          %956 = sbr.rel (%p954) target = $region60
        $region59: #{tpu_custom_call.1} parent=55 // pred_region
          %s957 = sand.u32 %s192, 1
          %s958 = scalar_lea.sflag [#allocation3], %s957
          %s959 = sand.u32 %s192, 1
          %s960 = smul.addr %s959, 32
          %s961 = scalar_lea.vmem [#allocation2], %s960
          %962 = dma.done %s958, 512
        $region60: #{tpu_custom_call.1} parent=55 // pred_fallthru
          _
      $region56: #{tpu_custom_call.1} parent=5 // pred_fallthru
        _
    $region6: #{tpu_custom_call.1} parent=1 // loop_footer
      %s20 = sadd.s32 1, %s16
    $region7: #{tpu_custom_call.1} parent=1 // loop_footer_branch
      %15 = sbr.rel target = $region3
    $region8: #{tpu_custom_call.1} parent=1 // loop_exit
      _
    %963 = vsyncpa [#allocation3], 1
    %s964 = scalar_lea.sflag [#allocation3], 1
    %965 = vsyncpa %s964, 1

</llo_original>
